<compile_context>
chip_gen: v7x
topology: tpu7x:2x2x1
jax: 0.10.0
libtpu: 0.0.40
codegen_flags: <defaults>
</compile_context>

<pallas_src>
import numpy as np
import jax
import jax.numpy as jnp
from jax.experimental import pallas as pl
from jax.experimental.pallas import tpu as pltpu


_LANE = 128
_MAX_HW_TILE = 16384


def _round_up(x, m):
    return (x + m - 1) // m * m


def _sublane(itemsize):
    # Native sublane count: 8 for 4-byte dtypes, 16 for 2-byte, 32 for 1-byte.
    return max(8, 32 // max(1, itemsize))


def _vmem_budget_bytes():
    """Block budget kept under each generation's scoped-VMEM default."""
    try:
        kind = jax.devices()[0].device_kind.lower()
    except Exception:
        kind = ""
    if ("v6" in kind) or ("v7" in kind):
        return 28 * 1024 * 1024   # scoped default 32 MiB on v6e/v7x
    return 12 * 1024 * 1024       # safe under v5e's 16 MiB scoped default


def _pick_tiles(rows, hw, itemsize):
    """Lane-dense hw tile + dtype-aware row tile sized to the chip's VMEM budget."""
    sublane = _sublane(itemsize)
    if hw <= _LANE:
        hw_tile = hw                                   # full-dim block (allowed)
    else:
        hw_tile = min((hw // _LANE) * _LANE, _MAX_HW_TILE)
    # 2 inputs + 2 outputs, double-buffered, plus slack => ~10x per element.
    per_row = hw_tile * itemsize * 10
    budget = _vmem_budget_bytes()
    row_cap = max(sublane, (budget // per_row) // sublane * sublane)
    if rows < sublane:
        row_tile = rows                                # full-dim block (allowed)
    else:
        row_tile = int(min((rows // sublane) * sublane, row_cap))
    return row_tile, hw_tile


def _complex_dropout2d_kernel(xr_ref, xi_ref, sr_ref, si_ref, or_ref, oi_ref):
    """One (row_tile, hw_tile) block of real+imag; per-row scale broadcast along lanes."""
    sr = sr_ref[...]                       # (row_tile, 1) float32: 0 or 1/(1-p)
    si = si_ref[...]
    or_ref[...] = (xr_ref[...] * sr).astype(or_ref.dtype)
    oi_ref[...] = (xi_ref[...] * si).astype(oi_ref.dtype)


def _dropout2d_scales(key, n_channels, p, share_mask, dtype=jnp.float32):
    """Per-(N*C) channel scale: 0.0 for dropped channels, 1/(1-p) for kept ones."""
    if p <= 0.0:
        ones = jnp.ones((n_channels, 1), dtype)
        return ones, ones
    if p >= 1.0:
        zeros = jnp.zeros((n_channels, 1), dtype)
        return zeros, zeros
    inv_keep = jnp.asarray(1.0 / (1.0 - p), dtype)
    if share_mask:
        keep = jax.random.bernoulli(key, 1.0 - p, (n_channels, 1))
        s = keep.astype(dtype) * inv_keep
        return s, s
    kr, ki = jax.random.split(key)
    sr = jax.random.bernoulli(kr, 1.0 - p, (n_channels, 1)).astype(dtype) * inv_keep
    si = jax.random.bernoulli(ki, 1.0 - p, (n_channels, 1)).astype(dtype) * inv_keep
    return sr, si


def complex_dropout2d(x_r, x_i, key, p=0.5, training=True, share_mask=True,
                      min_pallas_bytes=1 << 20):
    """Functional ComplexDropout2d forward. x_*: (N, C, H, W). Returns (out_r, out_i)."""
    assert x_r.shape == x_i.shape and x_r.ndim == 4
    if (not training) or p <= 0.0:
        return x_r, x_i
    N, C, H, W = x_r.shape
    rows, hw = N * C, H * W
    if p >= 1.0:
        return jnp.zeros_like(x_r), jnp.zeros_like(x_i)

    sr, si = _dropout2d_scales(key, rows, p, share_mask)

    # Tiny inputs: pallas_call launch + pipeline priming dwarfs the data movement.
    total_bytes = 2 * rows * hw * x_r.dtype.itemsize
    if total_bytes < min_pallas_bytes:
        out_r = (x_r * sr.reshape(N, C, 1, 1)).astype(x_r.dtype)
        out_i = (x_i * si.reshape(N, C, 1, 1)).astype(x_i.dtype)
        return out_r, out_i

    # Flatten so the lane dim is H*W (lane-dense), rows = channels (mask granularity).
    xr2 = x_r.reshape(rows, hw)
    xi2 = x_i.reshape(rows, hw)

    row_tile, hw_tile = _pick_tiles(rows, hw, x_r.dtype.itemsize)
    # hw is the innermost grid axis so the per-row scale block DMA is elided across
    # consecutive steps.
    grid = (pl.cdiv(rows, row_tile), pl.cdiv(hw, hw_tile))
    data_spec = pl.BlockSpec((row_tile, hw_tile), lambda r, c: (r, c))
    scale_spec = pl.BlockSpec((row_tile, 1), lambda r, c: (r, 0))

    out_r2, out_i2 = pl.pallas_call(
        _complex_dropout2d_kernel,
        out_shape=(jax.ShapeDtypeStruct((rows, hw), x_r.dtype),
                   jax.ShapeDtypeStruct((rows, hw), x_i.dtype)),
        grid_spec=pltpu.PrefetchScalarGridSpec(
            num_scalar_prefetch=0,
            grid=grid,
            in_specs=[data_spec, data_spec, scale_spec, scale_spec],
            out_specs=(data_spec, data_spec),
        ),
        compiler_params=pltpu.CompilerParams(
            dimension_semantics=("parallel", "parallel")),
    )(xr2, xi2, sr, si)

    return out_r2.reshape(N, C, H, W), out_i2.reshape(N, C, H, W)


if __name__ == "__main__":
    key = jax.random.PRNGKey(0)
    kx, ky, kmask, kx2, ky2, kmask2 = jax.random.split(key, 6)

    # --- Main check: canonical small shape, Pallas path forced. ---
    N, C, H, W = 2, 4, 16, 16
    p = 0.5
    x_r = jax.random.normal(kx, (N, C, H, W), jnp.float32)
    x_i = jax.random.normal(ky, (N, C, H, W), jnp.float32)

    out_r, out_i = complex_dropout2d(x_r, x_i, kmask, p=p, training=True,
                                     share_mask=True, min_pallas_bytes=0)
    out_r = jax.block_until_ready(out_r)
    out_i = jax.block_until_ready(out_i)

    sr, si = _dropout2d_scales(kmask, N * C, p, share_mask=True)
    ref_r = x_r * sr.reshape(N, C, 1, 1)
    ref_i = x_i * si.reshape(N, C, 1, 1)
    assert out_r.shape == (N, C, H, W) and out_i.shape == (N, C, H, W)
    np.testing.assert_allclose(np.asarray(out_r), np.asarray(ref_r), rtol=1e-6, atol=1e-6)
    np.testing.assert_allclose(np.asarray(out_i), np.asarray(ref_i), rtol=1e-6, atol=1e-6)

    # Dropped channels fully zeroed, consistently in real and imag parts.
    dropped = np.asarray(sr).reshape(-1) == 0.0
    o_r = np.asarray(out_r).reshape(N * C, -1)
    o_i = np.asarray(out_i).reshape(N * C, -1)
    assert np.all(o_r[dropped] == 0.0) and np.all(o_i[dropped] == 0.0)

    # --- Ragged-edge check: rows and H*W not multiples of (8, 128). ---
    N2, C2, H2, W2 = 3, 5, 20, 15            # rows=15, hw=300 -> edge blocks on both axes
    x2_r = jax.random.normal(kx2, (N2, C2, H2, W2), jnp.float32)
    x2_i = jax.random.normal(ky2, (N2, C2, H2, W2), jnp.float32)
    o2_r, o2_i = complex_dropout2d(x2_r, x2_i, kmask2, p=0.3, training=True,
                                   share_mask=False, min_pallas_bytes=0)
    o2_r = jax.block_until_ready(o2_r)
    o2_i = jax.block_until_ready(o2_i)
    s2r, s2i = _dropout2d_scales(kmask2, N2 * C2, 0.3, share_mask=False)
    np.testing.assert_allclose(np.asarray(o2_r),
                               np.asarray(x2_r * s2r.reshape(N2, C2, 1, 1)),
                               rtol=1e-6, atol=1e-6)
    np.testing.assert_allclose(np.asarray(o2_i),
                               np.asarray(x2_i * s2i.reshape(N2, C2, 1, 1)),
                               rtol=1e-6, atol=1e-6)

    # --- Eval mode is the identity; p>=1 is all-zeros; tiny-input bypass matches. ---
    id_r, id_i = complex_dropout2d(x_r, x_i, kmask, p=p, training=False)
    np.testing.assert_allclose(np.asarray(id_r), np.asarray(x_r))
    np.testing.assert_allclose(np.asarray(id_i), np.asarray(x_i))
    z_r, z_i = complex_dropout2d(x_r, x_i, kmask, p=1.0, training=True)
    assert np.all(np.asarray(z_r) == 0.0) and np.all(np.asarray(z_i) == 0.0)
    by_r, by_i = complex_dropout2d(x_r, x_i, kmask, p=p, training=True, share_mask=True)
    np.testing.assert_allclose(np.asarray(by_r), np.asarray(out_r), rtol=1e-6, atol=1e-6)
    np.testing.assert_allclose(np.asarray(by_i), np.asarray(out_i), rtol=1e-6, atol=1e-6)

    print("KERNEL_OK")
</pallas_src>

<mosaic_0001>
module attributes {stable_mosaic.version = 11 : i64} {
  func.func @_complex_dropout2d_kernel(%arg0: i32, %arg1: i32, %arg2: memref<8x256xf32, #tpu.memory_space<vmem>>, %arg3: memref<8x256xf32, #tpu.memory_space<vmem>>, %arg4: memref<8x1xf32, #tpu.memory_space<vmem>>, %arg5: memref<8x1xf32, #tpu.memory_space<vmem>>, %arg6: memref<8x256xf32, #tpu.memory_space<vmem>>, %arg7: memref<8x256xf32, #tpu.memory_space<vmem>>) attributes {dimension_semantics = [#tpu.dimension_semantics<parallel>, #tpu.dimension_semantics<parallel>], iteration_bounds = array<i64: 1, 1>, scalar_prefetch = 0 : i64, scratch_operands = 0 : i64, tpu.core_type = #tpu.core_type<tc>, window_params = [{transform_indices = @transform_0, window_bounds = array<i64: 8, 256>}, {transform_indices = @transform_1, window_bounds = array<i64: 8, 256>}, {transform_indices = @transform_2, window_bounds = array<i64: 8, 1>}, {transform_indices = @transform_3, window_bounds = array<i64: 8, 1>}, {transform_indices = @transform_4, window_bounds = array<i64: 8, 256>}, {transform_indices = @transform_5, window_bounds = array<i64: 8, 256>}]} {
    %c0 = arith.constant 0 : index
    %c0_0 = arith.constant 0 : index
    %0 = vector.load %arg4[%c0, %c0_0] : memref<8x1xf32, #tpu.memory_space<vmem>>, vector<8x1xf32>
    %c0_1 = arith.constant 0 : index
    %c0_2 = arith.constant 0 : index
    %1 = vector.load %arg5[%c0_1, %c0_2] : memref<8x1xf32, #tpu.memory_space<vmem>>, vector<8x1xf32>
    %c0_3 = arith.constant 0 : index
    %c0_4 = arith.constant 0 : index
    %2 = vector.load %arg2[%c0_3, %c0_4] : memref<8x256xf32, #tpu.memory_space<vmem>>, vector<8x256xf32>
    %3 = vector.broadcast %0 : vector<8x1xf32> to vector<8x256xf32>
    %4 = arith.mulf %2, %3 : vector<8x256xf32>
    %c0_5 = arith.constant 0 : index
    %c0_6 = arith.constant 0 : index
    %5 = vector.load %arg6[%c0_5, %c0_6] : memref<8x256xf32, #tpu.memory_space<vmem>>, vector<8x256xf32>
    tpu.vector_store %arg6[%c0_5, %c0_6], %4 {strides = array<i32>} : memref<8x256xf32, #tpu.memory_space<vmem>>, vector<8x256xf32>,
    %c0_7 = arith.constant 0 : index
    %c0_8 = arith.constant 0 : index
    %6 = vector.load %arg3[%c0_7, %c0_8] : memref<8x256xf32, #tpu.memory_space<vmem>>, vector<8x256xf32>
    %7 = vector.broadcast %1 : vector<8x1xf32> to vector<8x256xf32>
    %8 = arith.mulf %6, %7 : vector<8x256xf32>
    %c0_9 = arith.constant 0 : index
    %c0_10 = arith.constant 0 : index
    %9 = vector.load %arg7[%c0_9, %c0_10] : memref<8x256xf32, #tpu.memory_space<vmem>>, vector<8x256xf32>
    tpu.vector_store %arg7[%c0_9, %c0_10], %8 {strides = array<i32>} : memref<8x256xf32, #tpu.memory_space<vmem>>, vector<8x256xf32>,
    return
  }
  func.func @transform_0(%arg0: i32, %arg1: i32) -> (i32, i32) {
    %c0_i32 = arith.constant 0 : i32
    return %arg0, %arg1 : i32, i32
  }
  func.func @transform_1(%arg0: i32, %arg1: i32) -> (i32, i32) {
    %c0_i32 = arith.constant 0 : i32
    return %arg0, %arg1 : i32, i32
  }
  func.func @transform_2(%arg0: i32, %arg1: i32) -> (i32, i32) {
    %c0_i32 = arith.constant 0 : i32
    %c0_i32_0 = arith.constant 0 : i32
    return %arg0, %c0_i32 : i32, i32
  }
  func.func @transform_3(%arg0: i32, %arg1: i32) -> (i32, i32) {
    %c0_i32 = arith.constant 0 : i32
    %c0_i32_0 = arith.constant 0 : i32
    return %arg0, %c0_i32 : i32, i32
  }
  func.func @transform_4(%arg0: i32, %arg1: i32) -> (i32, i32) {
    %c0_i32 = arith.constant 0 : i32
    return %arg0, %arg1 : i32, i32
  }
  func.func @transform_5(%arg0: i32, %arg1: i32) -> (i32, i32) {
    %c0_i32 = arith.constant 0 : i32
    return %arg0, %arg1 : i32, i32
  }
}

</mosaic_0001>

<llo_original>
// kernel: tpu_custom_call.1
$region0: #{tpu_custom_call.1}
  #allocation0 [shape = 'u32[]', space=smem, size = 0x4, offset = 0x4, fixed_abs, tag = 'smem constant byte address 0x4 - core index']
  #allocation1 [shape = 'u32[144,128]{1,0:T(1,128)}', space=vmem, size = 0x12000, scoped, tag = 'internal scratch']
  %s0 = inlined_call_operand.vmem [shape: f32[8,256], index: 0, kind: input, shape index: {}]
  %s1 = inlined_call_operand.hbm [shape: f32[8,256], index: 1, kind: input, shape index: {}]
  %s2 = inlined_call_operand.vmem [shape: f32[8,1], index: 2, kind: input, shape index: {}]
  %s3 = inlined_call_operand.vmem [shape: f32[8,1], index: 3, kind: input, shape index: {}]
  %s4 = inlined_call_operand.hbm [shape: f32[8,256], index: 4, kind: output, shape index: {0}]
  %s5 = inlined_call_operand.hbm [shape: f32[8,256], index: 5, kind: output, shape index: {1}]
  %6 = xla_tuple %s4, %s5
  %s7 = sld [smem:[#allocation0]]
  $region38: #{tpu_custom_call.1} parent=0
    _
  %s9 = ssub.s32 1, %s7
  %s10 = scalar_select 0, %s9, %s7
  $region1: #{tpu_custom_call.1} parent=0
    #allocation2 [shape = 'u8[8192]{0}', space=vmem, size = 0x2000, scoped, tag = 'input window, operand 1, single buffered']
    #allocation3 [shape = 's32[1]{0}', space=sflag, size = 0x4, scoped, tag = 'scoped memory for tpu_custom_call.1']
    #allocation4 [shape = 's32[1]{0}', space=sflag, size = 0x4, scoped, tag = 'scoped memory for tpu_custom_call.1']
    #allocation5 [shape = 'u8[8192]{0}', space=vmem, size = 0x2000, scoped, tag = 'output window, operand 0, single buffered']
    #allocation6 [shape = 'u8[8192]{0}', space=vmem, size = 0x2000, scoped, tag = 'output window, operand 1, single buffered']
    #allocation7 [shape = 's32[1]{0}', space=sflag, size = 0x4, scoped, tag = 'scoped memory for tpu_custom_call.1']
    %11 = vsyncpa [#allocation3], 0
    %12 = vsyncpa [#allocation4], 0
    %13 = vsyncpa [#allocation7], 0
    // Predicated region
    $region2: #{tpu_custom_call.1} parent=1 // pred_check
      _
    $region3: #{tpu_custom_call.1} parent=1 // pred_check_branch
      %15 = sbr.rel (0) target = $region5
    $region4: #{tpu_custom_call.1} parent=1 // pred_region
      _
    $region5: #{tpu_custom_call.1} parent=1 // pred_fallthru
      _
    // Predicated region
    $region6: #{tpu_custom_call.1} parent=1 // pred_check
      _
    $region7: #{tpu_custom_call.1} parent=1 // pred_check_branch
      %17 = sbr.rel (0) target = $region9
    $region8: #{tpu_custom_call.1} parent=1 // pred_region
      %s19 = ssub.s32 256, 256
      %20 = vsyncadd [#allocation3], %s19
      %s22 = sshll.u32 [#allocation2], 4
      %s23 = int_to_ptr.vmem [resolvable:$true] %s22
      %25 = dma.hbm_to_vmem [thread:$0]  %s1, 256, %s23, [#allocation3]
    $region9: #{tpu_custom_call.1} parent=1 // pred_fallthru
      _
    // Predicated region
    $region10: #{tpu_custom_call.1} parent=1 // pred_check
      _
    $region11: #{tpu_custom_call.1} parent=1 // pred_check_branch
      %27 = sbr.rel (0) target = $region13
    $region12: #{tpu_custom_call.1} parent=1 // pred_region
      _
    $region13: #{tpu_custom_call.1} parent=1 // pred_fallthru
      _
    // Predicated region
    $region14: #{tpu_custom_call.1} parent=1 // pred_check
      _
    $region15: #{tpu_custom_call.1} parent=1 // pred_check_branch
      %29 = sbr.rel (0) target = $region17
    $region16: #{tpu_custom_call.1} parent=1 // pred_region
      _
    $region17: #{tpu_custom_call.1} parent=1 // pred_fallthru
      _
    // Predicated region
    $region18: #{tpu_custom_call.1} parent=1 // pred_check
      _
    $region19: #{tpu_custom_call.1} parent=1 // pred_check_branch
      %31 = sbr.rel (0) target = $region21
    $region20: #{tpu_custom_call.1} parent=1 // pred_region
      %32 = dma.done [#allocation3], 256
    $region21: #{tpu_custom_call.1} parent=1 // pred_fallthru
      _
    %v33 = vld [vmem:[%s2] sm:$0xff]
    %v34 = vld [vmem:[%s3] sm:$0xff]
    %v35 = vld [vmem:[%s0] sm:$0xff]
    %v36 = vld [vmem:[%s0 + $0x8] sm:$0xff]
    %38 = vset.pattern.permute.xlu0 0
    %39 = vperm.xlu0 %38, %v33
    %v40 = vpop.permute.xlu0 %39
    %v42 = vmul.f32 %v35, %v40
    %v43 = vmul.f32 %v36, %v40
    %44 = vst [vmem:[#allocation5] sm:$0xff] %v42
    %45 = vst [vmem:[#allocation5 + $0x8] sm:$0xff] %v43
    %v46 = vld [vmem:[#allocation2] sm:$0xff]
    %v47 = vld [vmem:[#allocation2 + $0x8] sm:$0xff]
    %49 = vset.pattern.permute.xlu0 0
    %50 = vperm.xlu0 %49, %v34
    %v51 = vpop.permute.xlu0 %50
    %v53 = vmul.f32 %v46, %v51
    %v54 = vmul.f32 %v47, %v51
    %55 = vst [vmem:[#allocation6] sm:$0xff] %v53
    %56 = vst [vmem:[#allocation6 + $0x8] sm:$0xff] %v54
    // Predicated region
    $region22: #{tpu_custom_call.1} parent=1 // pred_check
      _
    $region23: #{tpu_custom_call.1} parent=1 // pred_check_branch
      %58 = sbr.rel (0) target = $region25
    $region24: #{tpu_custom_call.1} parent=1 // pred_region
      %s60 = ssub.s32 256, 256
      %61 = vsyncadd [#allocation4], %s60
      %s63 = sshll.u32 [#allocation5], 4
      %s64 = int_to_ptr.vmem [resolvable:$true] %s63
      %66 = dma.vmem_to_hbm [thread:$0]  %s64, 256, %s4, [#allocation4]
    $region25: #{tpu_custom_call.1} parent=1 // pred_fallthru
      _
    // Predicated region
    $region26: #{tpu_custom_call.1} parent=1 // pred_check
      _
    $region27: #{tpu_custom_call.1} parent=1 // pred_check_branch
      %68 = sbr.rel (0) target = $region29
    $region28: #{tpu_custom_call.1} parent=1 // pred_region
      %s70 = ssub.s32 256, 256
      %71 = vsyncadd [#allocation7], %s70
      %s73 = sshll.u32 [#allocation6], 4
      %s74 = int_to_ptr.vmem [resolvable:$true] %s73
      %76 = dma.vmem_to_hbm [thread:$0]  %s74, 256, %s5, [#allocation7]
    $region29: #{tpu_custom_call.1} parent=1 // pred_fallthru
      _
    // Predicated region
    $region30: #{tpu_custom_call.1} parent=1 // pred_check
      _
    $region31: #{tpu_custom_call.1} parent=1 // pred_check_branch
      %78 = sbr.rel (0) target = $region33
    $region32: #{tpu_custom_call.1} parent=1 // pred_region
      %79 = dma.done [#allocation4], 256
    $region33: #{tpu_custom_call.1} parent=1 // pred_fallthru
      _
    // Predicated region
    $region34: #{tpu_custom_call.1} parent=1 // pred_check
      _
    $region35: #{tpu_custom_call.1} parent=1 // pred_check_branch
      %81 = sbr.rel (0) target = $region37
    $region36: #{tpu_custom_call.1} parent=1 // pred_region
      %82 = dma.done [#allocation7], 256
    $region37: #{tpu_custom_call.1} parent=1 // pred_fallthru
      _
    %83 = vsyncpa [#allocation3], 1
    %84 = vsyncpa [#allocation4], 1
    %85 = vsyncpa [#allocation7], 1

</llo_original>
